<compile_context>
chip_gen: v7x
topology: tpu7x:2x2x1
jax: 0.10.0
libtpu: 0.0.40
codegen_flags: <defaults>
</compile_context>

<pallas_src>
import jax
import jax.numpy as jnp
from jax.experimental import pallas as pl
from jax.experimental.pallas import tpu as pltpu


def _copy_kernel(x_ref, o_ref):
    # Bare lane-dense copy; the flatten itself is a free view in the wrapper.
    o_ref[...] = x_ref[...]


def _vmem_budget_bytes() -> int:
    """Generation-aware VMEM budget (double-buffered in+out must fit)."""
    try:
        cap = int(pltpu.get_tpu_info().vmem_capacity_bytes)
    except Exception:
        cap = 64 * 1024 * 1024  # conservative: v7x physical VMEM
    # Use at most half of physical VMEM, capped at 48 MiB.
    return min(cap // 2, 48 * 1024 * 1024)


def _pick_lane_width(total: int, sub: int) -> int | None:
    """Largest multiple of 128 (<= 16384) dividing `total`, preferring a
    factorization whose row count is at least one full sublane group."""
    if total % 128 != 0:
        return None
    best = None
    for cand in range(16384, 127, -128):
        if total % cand == 0:
            if best is None:
                best = cand
            if (total // cand) >= sub:
                return cand
    return best


def _pick_row_tile(rows: int, row_bytes: int, sub: int, tile_cap_bytes: int) -> int:
    """Row-tile: full extent if it fits the byte budget, else the largest
    sublane-aligned multiple that does."""
    budget_rows = max(1, tile_cap_bytes // max(1, row_bytes))
    if rows <= budget_rows:
        return rows  # full-extent block is always layout-legal
    return max(sub, (budget_rows // sub) * sub)


def flatten(x, *, elide_copy: bool = False):
    """Pallas equivalent of torch Flatten: (B, ...) -> (B, prod(rest))."""
    B = x.shape[0]
    flat = 1
    for d in x.shape[1:]:
        flat *= d

    # Metadata-only reshape == torch .view(B, -1) element order.
    out_2d = x.reshape(B, flat)
    total = B * flat

    if elide_copy or total == 0:
        # Flatten is zero semantic work for contiguous data; skip the copy.
        return out_2d

    itemsize = jnp.dtype(x.dtype).itemsize
    sub = max(8, 32 // itemsize)          # dtype-aware sublane multiple
    vmem_budget = _vmem_budget_bytes()
    tile_cap_bytes = vmem_budget // 5     # 4x tile (dbl-buffered in+out) + slack

    # Re-factorize the flat data into a lane-dense (R, Lw) view when possible.
    L = _pick_lane_width(total, sub)
    if L is None:
        # total not a multiple of 128: copy the (B, flat) view directly,
        # cdiv grid masks the (rare) edge blocks instead of going full-extent.
        view = out_2d
        R, Lw = B, flat
        tl = flat if flat < 128 else min((flat // 128) * 128, 16384)
    else:
        R, Lw = total // L, L
        view = out_2d.reshape(R, Lw)
        tl = Lw

    tr = _pick_row_tile(R, tl * itemsize, sub, tile_cap_bytes)
    grid_r = pl.cdiv(R, tr)
    grid_c = pl.cdiv(Lw, tl)

    # If a large copy collapsed to a single block, split rows so v7x's two
    # TensorCores can each take half (harmless on single-TC v5e/v6e).
    total_bytes = total * itemsize
    if grid_r == 1 and grid_c == 1 and R >= 2 * sub and total_bytes > (4 << 20):
        half = -(-R // 2)                 # ceil(R / 2)
        tr = -(-half // sub) * sub        # round up to sublane multiple
        grid_r = pl.cdiv(R, tr)

    copied = pl.pallas_call(
        _copy_kernel,
        out_shape=jax.ShapeDtypeStruct((R, Lw), x.dtype),
        grid_spec=pltpu.PrefetchScalarGridSpec(
            num_scalar_prefetch=0,
            grid=(grid_r, grid_c),
            in_specs=[pl.BlockSpec((tr, tl), lambda i, j: (i, j))],
            out_specs=pl.BlockSpec((tr, tl), lambda i, j: (i, j)),
        ),
        compiler_params=pltpu.CompilerParams(
            dimension_semantics=("parallel", "parallel"),
            vmem_limit_bytes=int(vmem_budget),
        ),
        cost_estimate=pl.CostEstimate(
            flops=0,
            transcendentals=0,
            bytes_accessed=2 * total_bytes,
        ),
    )(view)

    # Free reshape back to the torch output shape (B, flat).
    return copied.reshape(B, flat)


if __name__ == "__main__":
    key = jax.random.PRNGKey(0)
    # Small NCHW input consistent with a conv-net feature map.
    x = jax.random.normal(key, (2, 4, 16, 16), dtype=jnp.float32)

    ref = x.reshape(x.shape[0], -1)  # same semantics as torch .view(B, -1)

    # Kernel path (Pallas copy over the lane-dense re-factorized view).
    out = flatten(x)
    out = jax.block_until_ready(out)
    assert out.shape == (2, 4 * 16 * 16), out.shape
    assert out.dtype == x.dtype
    assert jnp.array_equal(out, ref)

    # Copy-elided path (metadata-only reshape, recommended in production).
    out_elided = jax.block_until_ready(flatten(x, elide_copy=True))
    assert out_elided.shape == ref.shape
    assert jnp.array_equal(out_elided, ref)

    print("KERNEL_OK")
</pallas_src>

<mosaic_0001>
module attributes {stable_mosaic.version = 11 : i64} {
  func.func @_copy_kernel(%arg0: i32, %arg1: i32, %arg2: memref<8x256xf32, #tpu.memory_space<vmem>>, %arg3: memref<8x256xf32, #tpu.memory_space<vmem>>) attributes {dimension_semantics = [#tpu.dimension_semantics<parallel>, #tpu.dimension_semantics<parallel>], iteration_bounds = array<i64: 1, 1>, scalar_prefetch = 0 : i64, scratch_operands = 0 : i64, tpu.core_type = #tpu.core_type<tc>, window_params = [{transform_indices = @transform_0, window_bounds = array<i64: 8, 256>}, {transform_indices = @transform_1, window_bounds = array<i64: 8, 256>}]} {
    %c0 = arith.constant 0 : index
    %c0_0 = arith.constant 0 : index
    %0 = vector.load %arg2[%c0, %c0_0] : memref<8x256xf32, #tpu.memory_space<vmem>>, vector<8x256xf32>
    %c0_1 = arith.constant 0 : index
    %c0_2 = arith.constant 0 : index
    %1 = vector.load %arg3[%c0_1, %c0_2] : memref<8x256xf32, #tpu.memory_space<vmem>>, vector<8x256xf32>
    tpu.vector_store %arg3[%c0_1, %c0_2], %0 {strides = array<i32>} : memref<8x256xf32, #tpu.memory_space<vmem>>, vector<8x256xf32>,
    return
  }
  func.func @transform_0(%arg0: i32, %arg1: i32) -> (i32, i32) {
    %c0_i32 = arith.constant 0 : i32
    return %arg0, %arg1 : i32, i32
  }
  func.func @transform_1(%arg0: i32, %arg1: i32) -> (i32, i32) {
    %c0_i32 = arith.constant 0 : i32
    return %arg0, %arg1 : i32, i32
  }
}

</mosaic_0001>

<llo_original>
// kernel: tpu_custom_call.1
$region0: #{tpu_custom_call.1}
  #allocation0 [shape = 'u32[]', space=smem, size = 0x4, offset = 0x4, fixed_abs, tag = 'smem constant byte address 0x4 - core index']
  #allocation1 [shape = 'u32[144,128]{1,0:T(1,128)}', space=vmem, size = 0x12000, scoped, tag = 'internal scratch']
  %s0 = inlined_call_operand.hbm [shape: f32[8,256], index: 0, kind: input, shape index: {}]
  %s1 = inlined_call_operand.hbm [shape: f32[8,256], index: 1, kind: output, shape index: {}]
  %s2 = sld [smem:[#allocation0]]
  $region18: #{tpu_custom_call.1} parent=0
    _
  %s4 = ssub.s32 1, %s2
  %s5 = scalar_select 0, %s4, %s2
  $region1: #{tpu_custom_call.1} parent=0
    #allocation2 [shape = 'u8[8192]{0}', space=vmem, size = 0x2000, scoped, tag = 'input window, operand 0, single buffered']
    #allocation3 [shape = 's32[1]{0}', space=sflag, size = 0x4, scoped, tag = 'scoped memory for tpu_custom_call.1']
    #allocation4 [shape = 's32[1]{0}', space=sflag, size = 0x4, scoped, tag = 'scoped memory for tpu_custom_call.1']
    #allocation5 [shape = 'u8[8192]{0}', space=vmem, size = 0x2000, scoped, tag = 'output window, operand 0, single buffered']
    %6 = vsyncpa [#allocation3], 0
    %7 = vsyncpa [#allocation4], 0
    // Predicated region
    $region2: #{tpu_custom_call.1} parent=1 // pred_check
      _
    $region3: #{tpu_custom_call.1} parent=1 // pred_check_branch
      %9 = sbr.rel (0) target = $region5
    $region4: #{tpu_custom_call.1} parent=1 // pred_region
      %s11 = ssub.s32 256, 256
      %12 = vsyncadd [#allocation3], %s11
      %s14 = sshll.u32 [#allocation2], 4
      %s15 = int_to_ptr.vmem [resolvable:$true] %s14
      %17 = dma.hbm_to_vmem [thread:$0]  %s0, 256, %s15, [#allocation3]
    $region5: #{tpu_custom_call.1} parent=1 // pred_fallthru
      _
    // Predicated region
    $region6: #{tpu_custom_call.1} parent=1 // pred_check
      _
    $region7: #{tpu_custom_call.1} parent=1 // pred_check_branch
      %19 = sbr.rel (0) target = $region9
    $region8: #{tpu_custom_call.1} parent=1 // pred_region
      %20 = dma.done [#allocation3], 256
    $region9: #{tpu_custom_call.1} parent=1 // pred_fallthru
      _
    %v21 = vld [vmem:[#allocation2] sm:$0xff]
    %v22 = vld [vmem:[#allocation2 + $0x8] sm:$0xff]
    %23 = vst [vmem:[#allocation5] sm:$0xff] %v21
    %24 = vst [vmem:[#allocation5 + $0x8] sm:$0xff] %v22
    // Predicated region
    $region10: #{tpu_custom_call.1} parent=1 // pred_check
      _
    $region11: #{tpu_custom_call.1} parent=1 // pred_check_branch
      %26 = sbr.rel (0) target = $region13
    $region12: #{tpu_custom_call.1} parent=1 // pred_region
      %s28 = ssub.s32 256, 256
      %29 = vsyncadd [#allocation4], %s28
      %s31 = sshll.u32 [#allocation5], 4
      %s32 = int_to_ptr.vmem [resolvable:$true] %s31
      %34 = dma.vmem_to_hbm [thread:$0]  %s32, 256, %s1, [#allocation4]
    $region13: #{tpu_custom_call.1} parent=1 // pred_fallthru
      _
    // Predicated region
    $region14: #{tpu_custom_call.1} parent=1 // pred_check
      _
    $region15: #{tpu_custom_call.1} parent=1 // pred_check_branch
      %36 = sbr.rel (0) target = $region17
    $region16: #{tpu_custom_call.1} parent=1 // pred_region
      %37 = dma.done [#allocation4], 256
    $region17: #{tpu_custom_call.1} parent=1 // pred_fallthru
      _
    %38 = vsyncpa [#allocation3], 1
    %39 = vsyncpa [#allocation4], 1

</llo_original>
